<compile_context>
chip_gen: v5e
topology: v5e:2x2
jax: 0.10.0
libtpu: 0.0.40
codegen_flags: <defaults>
</compile_context>

<pallas_src>
import functools

import jax
import jax.numpy as jnp
from jax.experimental import pallas as pl
from jax.experimental.pallas import tpu as pltpu

ENC_OUT_DIM = 512   # module default enc_out_dim
LATENT_DIM = 256    # module default latent_dim


def _round_up(x, m):
    return ((x + m - 1) // m) * m


# ---------------------------------------------------------------------------
# Kernel 1: transforms.functional.normalize(x, mean, std)  (elementwise)
# ---------------------------------------------------------------------------
def _normalize_kernel(x_ref, scale_ref, shift_ref, o_ref):
    # (x - mean) / std  ==  x * (1/std) + (-mean/std); scale/shift are per-row.
    o_ref[...] = x_ref[...] * scale_ref[...] + shift_ref[...]


def normalize_image(x, mean=(0.5, 0.5, 0.5), std=(0.5, 0.5, 0.5)):
    """Per-channel normalize of an NCHW image on a lane-dense [B*C, H*W] view."""
    B, C, H, W = x.shape
    x2d = x.reshape(B * C, H * W)
    mean = jnp.asarray(mean, jnp.float32)
    std = jnp.asarray(std, jnp.float32)
    # Row order of x2d is (b0,c0),(b0,c1),(b0,c2),(b1,c0),... -> tile channel vals.
    scale = jnp.tile(1.0 / std, B).reshape(B * C, 1)
    shift = jnp.tile(-mean / std, B).reshape(B * C, 1)

    out = pl.pallas_call(
        _normalize_kernel,
        out_shape=jax.ShapeDtypeStruct((B * C, H * W), x.dtype),
        grid=(1,),
        in_specs=[
            pl.BlockSpec((B * C, H * W), lambda i: (0, 0)),
            pl.BlockSpec((B * C, 1), lambda i: (0, 0)),
            pl.BlockSpec((B * C, 1), lambda i: (0, 0)),
        ],
        out_specs=pl.BlockSpec((B * C, H * W), lambda i: (0, 0)),
    )(x2d, scale, shift)
    return out.reshape(B, C, H, W)


# ---------------------------------------------------------------------------
# Kernel 2: fused VAE head  (fc_mu + fc_var + reparameterise in ONE kernel)
# ---------------------------------------------------------------------------
def _vae_head_eval_kernel(x_ref, w_ref, b_ref, z_ref, *, latent_dim):
    # y = x @ [W_mu | W_var] + [b_mu | b_var]; bf16 MXU operands, f32 accumulate.
    y = jnp.dot(x_ref[...].astype(jnp.bfloat16), w_ref[...],
                preferred_element_type=jnp.float32)
    y = y + b_ref[...]
    # eval-mode reparameterise: z = mu (lane-dense 256-wide store).
    z_ref[...] = y[:, :latent_dim].astype(z_ref.dtype)


def _vae_head_train_kernel(x_ref, w_ref, b_ref, eps_ref, z_ref, *, latent_dim):
    y = jnp.dot(x_ref[...].astype(jnp.bfloat16), w_ref[...],
                preferred_element_type=jnp.float32)
    y = y + b_ref[...]
    mu = y[:, :latent_dim]
    log_var = y[:, latent_dim:]
    std = jnp.exp(0.5 * log_var)                      # EUP, f32
    z_ref[...] = (mu + eps_ref[...].astype(jnp.float32) * std).astype(z_ref.dtype)


def vae_head(x_encoded, params, *, training=False, eps=None, block_batch=None):
    """mu, log_var = fc_mu(h), fc_var(h);  z = reparameterise(mu, log_var).

    x_encoded: [B, enc_out_dim] f32 encoder features.
    params: (w_cat [enc_out, 2*latent] bf16, b_cat [1, 2*latent] f32).
    """
    w_cat, b_cat = params
    B, d_enc = x_encoded.shape
    two_l = w_cat.shape[1]
    latent = two_l // 2

    tb = block_batch if block_batch is not None else min(128, _round_up(B, 8))
    b_pad = _round_up(B, tb)
    if b_pad != B:
        x_encoded = jnp.pad(x_encoded, ((0, b_pad - B), (0, 0)))
        if eps is not None:
            eps = jnp.pad(eps, ((0, b_pad - B), (0, 0)))
    grid = (b_pad // tb,)

    x_spec = pl.BlockSpec((tb, d_enc), lambda i: (i, 0))
    w_spec = pl.BlockSpec((d_enc, two_l), lambda i: (0, 0))   # weight resident, 1 DMA
    b_spec = pl.BlockSpec((1, two_l), lambda i: (0, 0))       # single fused bias row
    z_spec = pl.BlockSpec((tb, latent), lambda i: (i, 0))
    cparams = pltpu.CompilerParams(dimension_semantics=("parallel",))
    out_shape = jax.ShapeDtypeStruct((b_pad, latent), jnp.float32)

    if training:
        if eps is None:
            raise ValueError("training=True requires eps of shape [B, latent_dim]")
        z = pl.pallas_call(
            functools.partial(_vae_head_train_kernel, latent_dim=latent),
            out_shape=out_shape,
            grid=grid,
            in_specs=[x_spec, w_spec, b_spec,
                      pl.BlockSpec((tb, latent), lambda i: (i, 0))],
            out_specs=z_spec,
            compiler_params=cparams,
        )(x_encoded, w_cat, b_cat, eps)
    else:
        z = pl.pallas_call(
            functools.partial(_vae_head_eval_kernel, latent_dim=latent),
            out_shape=out_shape,
            grid=grid,
            in_specs=[x_spec, w_spec, b_spec],
            out_specs=z_spec,
            compiler_params=cparams,
        )(x_encoded, w_cat, b_cat)
    return z[:B]


# ---------------------------------------------------------------------------
# Parameter init + pure-JAX references
# ---------------------------------------------------------------------------
def init_vae_head_params(key, enc_out_dim=ENC_OUT_DIM, latent_dim=LATENT_DIM):
    """fc_mu / fc_var params. Weights stored [in, out] (transpose of PyTorch's
    [out, in]) and concatenated output-wise so the fused kernel does a single
    lane-dense matmul; stored bf16 for the MXU. Biases concatenated, f32."""
    k_mw, k_mb, k_vw, k_vb = jax.random.split(key, 4)
    s = 1.0 / jnp.sqrt(jnp.float32(enc_out_dim))
    w_mu = jax.random.uniform(k_mw, (enc_out_dim, latent_dim), jnp.float32, -s, s)
    b_mu = jax.random.uniform(k_mb, (latent_dim,), jnp.float32, -s, s)
    w_var = jax.random.uniform(k_vw, (enc_out_dim, latent_dim), jnp.float32, -s, s)
    b_var = jax.random.uniform(k_vb, (latent_dim,), jnp.float32, -s, s)
    w_cat = jnp.concatenate([w_mu, w_var], axis=1).astype(jnp.bfloat16)
    b_cat = jnp.concatenate([b_mu, b_var]).reshape(1, 2 * latent_dim)
    return (w_cat, b_cat)


def vae_head_reference(x_encoded, params, *, training=False, eps=None):
    w_cat, b_cat = params
    latent = w_cat.shape[1] // 2
    y = jnp.dot(x_encoded.astype(jnp.bfloat16), w_cat,
                preferred_element_type=jnp.float32) + b_cat
    mu, log_var = y[:, :latent], y[:, latent:]
    if training:
        return mu + eps * jnp.exp(0.5 * log_var)
    return mu


if __name__ == "__main__":
    key = jax.random.PRNGKey(0)
    k_img, k_enc, k_par, k_eps = jax.random.split(key, 4)

    B, C, H, W = 16, 3, 16, 16

    # --- stage 1: input normalization (Pallas) -----------------------------
    x_img = jax.random.uniform(k_img, (B, C, H, W), jnp.float32)
    x_norm = jax.block_until_ready(normalize_image(x_img))
    ref_norm = (x_img - 0.5) / 0.5
    assert jnp.allclose(x_norm, ref_norm, atol=1e-6, rtol=1e-6)

    # --- stage 2: encoder ---------------------------------------------------
    # TODO(synk): resnet18_encoder is an external torchvision/pl_bolts conv
    # backbone not translated to Pallas here; stand-in features of the correct
    # shape [B, enc_out_dim] feed the fused head kernel below.
    x_encoded = jax.random.normal(k_enc, (B, ENC_OUT_DIM), jnp.float32)

    # --- stage 3+4: fc_mu / fc_var + reparameterise (single fused kernel) ---
    params = init_vae_head_params(k_par)

    z_eval = jax.block_until_ready(
        vae_head(x_encoded, params, training=False, block_batch=8))
    ref_eval = vae_head_reference(x_encoded, params, training=False)
    assert z_eval.shape == (B, LATENT_DIM)
    assert jnp.allclose(z_eval, ref_eval, atol=2e-2, rtol=2e-2), \
        float(jnp.max(jnp.abs(z_eval - ref_eval)))

    eps = jax.random.normal(k_eps, (B, LATENT_DIM), jnp.float32)
    z_train = jax.block_until_ready(
        vae_head(x_encoded, params, training=True, eps=eps, block_batch=8))
    ref_train = vae_head_reference(x_encoded, params, training=True, eps=eps)
    assert z_train.shape == (B, LATENT_DIM)
    assert jnp.allclose(z_train, ref_train, atol=5e-2, rtol=5e-2), \
        float(jnp.max(jnp.abs(z_train - ref_train)))

    print("KERNEL_OK")
</pallas_src>

<mosaic_0001>
module attributes {stable_mosaic.version = 11 : i64} {
  func.func @_normalize_kernel(%arg0: i32, %arg1: memref<48x256xf32, #tpu.memory_space<vmem>>, %arg2: memref<48x1xf32, #tpu.memory_space<vmem>>, %arg3: memref<48x1xf32, #tpu.memory_space<vmem>>, %arg4: memref<48x256xf32, #tpu.memory_space<vmem>>) attributes {dimension_semantics = [#tpu.dimension_semantics<arbitrary>], iteration_bounds = array<i64: 1>, scalar_prefetch = 0 : i64, scratch_operands = 0 : i64, tpu.core_type = #tpu.core_type<tc>, window_params = [{pipeline_mode = #tpu.pipeline_mode<synchronous>, transform_indices = @transform_0, window_bounds = array<i64: 48, 256>}, {pipeline_mode = #tpu.pipeline_mode<synchronous>, transform_indices = @transform_1, window_bounds = array<i64: 48, 1>}, {pipeline_mode = #tpu.pipeline_mode<synchronous>, transform_indices = @transform_2, window_bounds = array<i64: 48, 1>}, {pipeline_mode = #tpu.pipeline_mode<synchronous>, transform_indices = @transform_3, window_bounds = array<i64: 48, 256>}]} {
    %c0 = arith.constant 0 : index
    %c0_0 = arith.constant 0 : index
    %0 = vector.load %arg1[%c0, %c0_0] : memref<48x256xf32, #tpu.memory_space<vmem>>, vector<48x256xf32>
    %c0_1 = arith.constant 0 : index
    %c0_2 = arith.constant 0 : index
    %1 = vector.load %arg2[%c0_1, %c0_2] : memref<48x1xf32, #tpu.memory_space<vmem>>, vector<48x1xf32>
    %2 = vector.broadcast %1 : vector<48x1xf32> to vector<48x256xf32>
    %3 = arith.mulf %0, %2 : vector<48x256xf32>
    %c0_3 = arith.constant 0 : index
    %c0_4 = arith.constant 0 : index
    %4 = vector.load %arg3[%c0_3, %c0_4] : memref<48x1xf32, #tpu.memory_space<vmem>>, vector<48x1xf32>
    %5 = vector.broadcast %4 : vector<48x1xf32> to vector<48x256xf32>
    %6 = arith.addf %3, %5 : vector<48x256xf32>
    %c0_5 = arith.constant 0 : index
    %c0_6 = arith.constant 0 : index
    %7 = vector.load %arg4[%c0_5, %c0_6] : memref<48x256xf32, #tpu.memory_space<vmem>>, vector<48x256xf32>
    tpu.vector_store %arg4[%c0_5, %c0_6], %6 {strides = array<i32>} : memref<48x256xf32, #tpu.memory_space<vmem>>, vector<48x256xf32>,
    return
  }
  func.func @transform_0(%arg0: i32) -> (i32, i32) {
    %c0_i32 = arith.constant 0 : i32
    %c0_i32_0 = arith.constant 0 : i32
    %c0_i32_1 = arith.constant 0 : i32
    return %c0_i32, %c0_i32_0 : i32, i32
  }
  func.func @transform_1(%arg0: i32) -> (i32, i32) {
    %c0_i32 = arith.constant 0 : i32
    %c0_i32_0 = arith.constant 0 : i32
    %c0_i32_1 = arith.constant 0 : i32
    return %c0_i32, %c0_i32_0 : i32, i32
  }
  func.func @transform_2(%arg0: i32) -> (i32, i32) {
    %c0_i32 = arith.constant 0 : i32
    %c0_i32_0 = arith.constant 0 : i32
    %c0_i32_1 = arith.constant 0 : i32
    return %c0_i32, %c0_i32_0 : i32, i32
  }
  func.func @transform_3(%arg0: i32) -> (i32, i32) {
    %c0_i32 = arith.constant 0 : i32
    %c0_i32_0 = arith.constant 0 : i32
    %c0_i32_1 = arith.constant 0 : i32
    return %c0_i32, %c0_i32_0 : i32, i32
  }
}

</mosaic_0001>

<llo_original>
// kernel: tpu_custom_call.1
$region0: #{tpu_custom_call.1}
  #allocation0 [shape = 'u32[]', space=smem, size = 0x4, offset = 0x4, fixed_abs, tag = 'smem constant byte address 0x4 - core index']
  #allocation1 [shape = 'u32[72,128]{1,0:T(1,128)}', space=vmem, size = 0x9000, scoped, tag = 'internal scratch']
  %s0 = inlined_call_operand.vmem [shape: f32[48,256], index: 0, kind: input, shape index: {}]
  %s1 = inlined_call_operand.vmem [shape: f32[48,1], index: 1, kind: input, shape index: {}]
  %s2 = inlined_call_operand.vmem [shape: f32[48,1], index: 2, kind: input, shape index: {}]
  %s3 = inlined_call_operand.hbm [shape: f32[48,256], index: 3, kind: output, shape index: {}]
  %s4 = sld [smem:[#allocation0]]
  $region22: #{tpu_custom_call.1} parent=0
    _
  %s6 = ssub.s32 1, %s4
  %s7 = scalar_select 0, %s6, %s4
  $region1: #{tpu_custom_call.1} parent=0
    #allocation2 [shape = 'u8[49152]{0}', space=vmem, size = 0xc000, scoped, tag = 'output window, operand 0, single buffered']
    #allocation3 [shape = 's32[1]{0}', space=sflag, size = 0x4, scoped, tag = 'scoped memory for tpu_custom_call.1']
    %8 = vsyncpa [#allocation3], 0
    // Predicated region
    $region2: #{tpu_custom_call.1} parent=1 // pred_check
      _
    $region3: #{tpu_custom_call.1} parent=1 // pred_check_branch
      %10 = sbr.rel (0) target = $region5
    $region4: #{tpu_custom_call.1} parent=1 // pred_region
      _
    $region5: #{tpu_custom_call.1} parent=1 // pred_fallthru
      _
    // Predicated region
    $region6: #{tpu_custom_call.1} parent=1 // pred_check
      _
    $region7: #{tpu_custom_call.1} parent=1 // pred_check_branch
      %12 = sbr.rel (0) target = $region9
    $region8: #{tpu_custom_call.1} parent=1 // pred_region
      _
    $region9: #{tpu_custom_call.1} parent=1 // pred_fallthru
      _
    // Predicated region
    $region10: #{tpu_custom_call.1} parent=1 // pred_check
      _
    $region11: #{tpu_custom_call.1} parent=1 // pred_check_branch
      %14 = sbr.rel (0) target = $region13
    $region12: #{tpu_custom_call.1} parent=1 // pred_region
      _
    $region13: #{tpu_custom_call.1} parent=1 // pred_fallthru
      _
    %v15 = vld [vmem:[%s0] sm:$0xff]
    %v16 = vld [vmem:[%s0 + $0x8] sm:$0xff]
    %v17 = vld [vmem:[%s0 + $0x10] sm:$0xff]
    %v18 = vld [vmem:[%s0 + $0x18] sm:$0xff]
    %v19 = vld [vmem:[%s0 + $0x20] sm:$0xff]
    %v20 = vld [vmem:[%s0 + $0x28] sm:$0xff]
    %v21 = vld [vmem:[%s0 + $0x30] sm:$0xff]
    %v22 = vld [vmem:[%s0 + $0x38] sm:$0xff]
    %v23 = vld [vmem:[%s0 + $0x40] sm:$0xff]
    %v24 = vld [vmem:[%s0 + $0x48] sm:$0xff]
    %v25 = vld [vmem:[%s0 + $0x50] sm:$0xff]
    %v26 = vld [vmem:[%s0 + $0x58] sm:$0xff]
    %v27 = vld [vmem:[%s1] sm:$0xff]
    %v28 = vld [vmem:[%s1 + $0x8] sm:$0xff]
    %v29 = vld [vmem:[%s1 + $0x10] sm:$0xff]
    %v30 = vld [vmem:[%s1 + $0x18] sm:$0xff]
    %v31 = vld [vmem:[%s1 + $0x20] sm:$0xff]
    %v32 = vld [vmem:[%s1 + $0x28] sm:$0xff]
    %34 = vset.pattern.permute.xlu0 0
    %35 = vperm.xlu0 %34, %v27
    %v36 = vpop.permute.xlu0 %35
    %39 = vset.pattern.permute.xlu0 0
    %40 = vperm.xlu0 %39, %v28
    %v41 = vpop.permute.xlu0 %40
    %44 = vset.pattern.permute.xlu0 0
    %45 = vperm.xlu0 %44, %v29
    %v46 = vpop.permute.xlu0 %45
    %49 = vset.pattern.permute.xlu0 0
    %50 = vperm.xlu0 %49, %v30
    %v51 = vpop.permute.xlu0 %50
    %54 = vset.pattern.permute.xlu0 0
    %55 = vperm.xlu0 %54, %v31
    %v56 = vpop.permute.xlu0 %55
    %59 = vset.pattern.permute.xlu0 0
    %60 = vperm.xlu0 %59, %v32
    %v61 = vpop.permute.xlu0 %60
    %v63 = vmul.f32 %v15, %v36
    %v64 = vmul.f32 %v16, %v36
    %v65 = vmul.f32 %v17, %v41
    %v66 = vmul.f32 %v18, %v41
    %v67 = vmul.f32 %v19, %v46
    %v68 = vmul.f32 %v20, %v46
    %v69 = vmul.f32 %v21, %v51
    %v70 = vmul.f32 %v22, %v51
    %v71 = vmul.f32 %v23, %v56
    %v72 = vmul.f32 %v24, %v56
    %v73 = vmul.f32 %v25, %v61
    %v74 = vmul.f32 %v26, %v61
    %v75 = vld [vmem:[%s2] sm:$0xff]
    %v76 = vld [vmem:[%s2 + $0x8] sm:$0xff]
    %v77 = vld [vmem:[%s2 + $0x10] sm:$0xff]
    %v78 = vld [vmem:[%s2 + $0x18] sm:$0xff]
    %v79 = vld [vmem:[%s2 + $0x20] sm:$0xff]
    %v80 = vld [vmem:[%s2 + $0x28] sm:$0xff]
    %82 = vset.pattern.permute.xlu0 0
    %83 = vperm.xlu0 %82, %v75
    %v84 = vpop.permute.xlu0 %83
    %87 = vset.pattern.permute.xlu0 0
    %88 = vperm.xlu0 %87, %v76
    %v89 = vpop.permute.xlu0 %88
    %92 = vset.pattern.permute.xlu0 0
    %93 = vperm.xlu0 %92, %v77
    %v94 = vpop.permute.xlu0 %93
    %97 = vset.pattern.permute.xlu0 0
    %98 = vperm.xlu0 %97, %v78
    %v99 = vpop.permute.xlu0 %98
    %102 = vset.pattern.permute.xlu0 0
    %103 = vperm.xlu0 %102, %v79
    %v104 = vpop.permute.xlu0 %103
    %107 = vset.pattern.permute.xlu0 0
    %108 = vperm.xlu0 %107, %v80
    %v109 = vpop.permute.xlu0 %108
    %v111 = vadd.f32 %v63, %v84
    %v112 = vadd.f32 %v64, %v84
    %v113 = vadd.f32 %v65, %v89
    %v114 = vadd.f32 %v66, %v89
    %v115 = vadd.f32 %v67, %v94
    %v116 = vadd.f32 %v68, %v94
    %v117 = vadd.f32 %v69, %v99
    %v118 = vadd.f32 %v70, %v99
    %v119 = vadd.f32 %v71, %v104
    %v120 = vadd.f32 %v72, %v104
    %v121 = vadd.f32 %v73, %v109
    %v122 = vadd.f32 %v74, %v109
    %123 = vst [vmem:[#allocation2] sm:$0xff] %v111
    %124 = vst [vmem:[#allocation2 + $0x8] sm:$0xff] %v112
    %125 = vst [vmem:[#allocation2 + $0x10] sm:$0xff] %v113
    %126 = vst [vmem:[#allocation2 + $0x18] sm:$0xff] %v114
    %127 = vst [vmem:[#allocation2 + $0x20] sm:$0xff] %v115
    %128 = vst [vmem:[#allocation2 + $0x28] sm:$0xff] %v116
    %129 = vst [vmem:[#allocation2 + $0x30] sm:$0xff] %v117
    %130 = vst [vmem:[#allocation2 + $0x38] sm:$0xff] %v118
    %131 = vst [vmem:[#allocation2 + $0x40] sm:$0xff] %v119
    %132 = vst [vmem:[#allocation2 + $0x48] sm:$0xff] %v120
    %133 = vst [vmem:[#allocation2 + $0x50] sm:$0xff] %v121
    %134 = vst [vmem:[#allocation2 + $0x58] sm:$0xff] %v122
    // Predicated region
    $region14: #{tpu_custom_call.1} parent=1 // pred_check
      _
    $region15: #{tpu_custom_call.1} parent=1 // pred_check_branch
      %136 = sbr.rel (0) target = $region17
    $region16: #{tpu_custom_call.1} parent=1 // pred_region
      %138 = vsyncadd [#allocation3], 0
      %s139 = sshll.u32 [#allocation2], 4
      %s140 = int_to_ptr.vmem [resolvable:$true] %s139
      %s141 = sshll.u32 %s3, 4
      %s142 = int_to_ptr.hbm [resolvable:$true] %s141
      %147 = dma.vmem_to_hbm [thread:$0]  %s140, 1536, %s142, [#allocation3], 256, 256, 16
    $region17: #{tpu_custom_call.1} parent=1 // pred_fallthru
      _
    // Predicated region
    $region18: #{tpu_custom_call.1} parent=1 // pred_check
      _
    $region19: #{tpu_custom_call.1} parent=1 // pred_check_branch
      %149 = sbr.rel (0) target = $region21
    $region20: #{tpu_custom_call.1} parent=1 // pred_region
      %151 = dma.done [#allocation3], 1536
    $region21: #{tpu_custom_call.1} parent=1 // pred_fallthru
      _
    %152 = vsyncpa [#allocation3], 1

</llo_original>
